<compile_context>
chip_gen: v7x
topology: tpu7x:2x2x1
jax: 0.10.0
libtpu: 0.0.40
codegen_flags: <defaults>
</compile_context>

<pallas_src>
import math

import jax
import jax.numpy as jnp
from jax.experimental import pallas as pl
from jax.experimental.pallas import tpu as pltpu

_LANE = 128     # vreg lane width
_SUBLANE = 8    # f32 sublane count


def _round_up(x, m):
    return ((x + m - 1) // m) * m


# --------------------------------------------------------------------------- #
# Kernel
# --------------------------------------------------------------------------- #
def ann_kernel(x_ref, w1_ref, b1_ref, w2_ref, b2_ref, w3_ref, b3_ref, o_ref):
    """One batch tile of the 4-matmul MLP. MXU accumulation is always f32."""
    cdt = w1_ref.dtype  # compute dtype fed to the MXU (f32 or bf16)

    # input_layer + relu  (x streamed unpadded; cast to compute dtype in-kernel)
    h = jnp.dot(x_ref[...].astype(cdt), w1_ref[...],
                preferred_element_type=jnp.float32)
    h = jnp.maximum(h + b1_ref[...], 0.0)
    # hidden_layer + relu (applied twice with the SAME weights, as in PyTorch)
    h = jnp.dot(h.astype(cdt), w2_ref[...], preferred_element_type=jnp.float32)
    h = jnp.maximum(h + b2_ref[...], 0.0)
    h = jnp.dot(h.astype(cdt), w2_ref[...], preferred_element_type=jnp.float32)
    h = jnp.maximum(h + b2_ref[...], 0.0)
    # output_layer (no activation), narrow lane-masked store (out_n << 128)
    out = jnp.dot(h.astype(cdt), w3_ref[...], preferred_element_type=jnp.float32)
    o_ref[...] = (out + b3_ref[...]).astype(o_ref.dtype)


# --------------------------------------------------------------------------- #
# Parameter preparation (run ONCE, outside the hot path)
# --------------------------------------------------------------------------- #
def prepare_ann_params(w1, b1, w2, b2, w3, b3, *, compute_dtype=jnp.float32):
    """Pad the hidden dim to 128 lanes and cast weights once.

    Weights are (in_features, out_features), i.e. transposed vs. torch.
    Zero-padding of the hidden dim is exact: relu(0)=0 propagates zeros.
    """
    in_n, hid = w1.shape
    out_n = w3.shape[1]
    hid_pad = _round_up(hid, _LANE)

    def pad2(a, rows, cols):
        return jnp.pad(a, ((0, rows - a.shape[0]), (0, cols - a.shape[1])))

    w1_p = pad2(w1, in_n, hid_pad).astype(compute_dtype)        # (in_n, hid_pad)
    w2_p = pad2(w2, hid_pad, hid_pad).astype(compute_dtype)     # (hid_pad, hid_pad)
    w3_p = pad2(w3, hid_pad, out_n).astype(compute_dtype)       # (hid_pad, out_n)
    # biases stay f32 (added to the f32 accumulator)
    b1_p = jnp.pad(b1, (0, hid_pad - hid)).reshape(1, hid_pad).astype(jnp.float32)
    b2_p = jnp.pad(b2, (0, hid_pad - hid)).reshape(1, hid_pad).astype(jnp.float32)
    b3_p = b3.reshape(1, out_n).astype(jnp.float32)
    return (w1_p, b1_p, w2_p, b2_p, w3_p, b3_p)


# --------------------------------------------------------------------------- #
# Batch tiling policy
# --------------------------------------------------------------------------- #
def _choose_batch_tile(B, *, max_tile=1024, small_tile=256):
    """Tiles of ~256..1024 rows; for B > small_tile keep >= 2 grid steps so the
    batch axis shards across both TensorCores on v7x."""
    b8 = _round_up(max(B, 1), _SUBLANE)
    if b8 <= small_tile:
        return b8                                   # tiny batch: single step
    n_steps = max(2, pl.cdiv(b8, max_tile))         # at least 2 parallel steps
    bt = _round_up(pl.cdiv(b8, n_steps), _SUBLANE)
    return max(min(bt, max_tile), _SUBLANE)


# --------------------------------------------------------------------------- #
# Forward wrapper
# --------------------------------------------------------------------------- #
def ann_forward(x, params, *, batch_tile=None, out_dtype=None):
    w1_p, b1_p, w2_p, b2_p, w3_p, b3_p = params
    B, in_n = x.shape
    assert w1_p.shape[0] == in_n, "x feature dim must match W1"
    hid_pad = w1_p.shape[1]
    out_n = w3_p.shape[1]
    compute_dtype = w1_p.dtype
    out_dtype = x.dtype if out_dtype is None else out_dtype

    # ---- batch tiling (x streamed; weights/biases resident across the grid) ----
    bt = _choose_batch_tile(B) if batch_tile is None else _round_up(
        min(batch_tile, _round_up(B, _SUBLANE)), _SUBLANE)
    b_pad = _round_up(B, bt)
    grid = (b_pad // bt,)

    x_p = x if b_pad == B else jnp.pad(x, ((0, b_pad - B), (0, 0)))

    # ---- VMEM budget (lane-padded layouts), capped well below v7x's 64 MiB ----
    in_lane = _round_up(in_n, _LANE)
    out_lane = _round_up(out_n, _LANE)
    x_item = jnp.dtype(x.dtype).itemsize
    c_item = jnp.dtype(compute_dtype).itemsize
    o_item = jnp.dtype(out_dtype).itemsize
    vmem = 2 * bt * in_lane * x_item                                   # x buffers
    vmem += 2 * bt * out_lane * o_item                                 # out buffers
    vmem += 2 * (in_lane * hid_pad + hid_pad * hid_pad
                 + hid_pad * out_lane) * c_item                        # weights
    vmem += 2 * _SUBLANE * (2 * hid_pad + out_lane) * 4                # biases
    vmem += 3 * bt * hid_pad * 4                                       # live f32 h
    vmem_limit = int(min(max(4 * vmem, 8 << 20), 48 << 20))

    # ---- cost estimate with real (unpadded-stream) byte counts ----
    flops = 2 * b_pad * (in_n * hid_pad + 2 * hid_pad * hid_pad + hid_pad * out_n)
    bytes_accessed = (
        x_p.size * x_item
        + (w1_p.size + w2_p.size + w3_p.size) * c_item
        + (b1_p.size + b2_p.size + b3_p.size) * 4
        + b_pad * out_n * o_item
    )

    y = pl.pallas_call(
        ann_kernel,
        out_shape=jax.ShapeDtypeStruct((b_pad, out_n), out_dtype),
        grid=grid,
        in_specs=[
            # x streamed over batch; full-extent (unpadded) feature dim.
            # (If profiling shows exposed x DMA, add pipeline_mode=pl.Buffered(3).)
            pl.BlockSpec((bt, in_n), lambda i: (i, 0)),
            pl.BlockSpec((in_n, hid_pad), lambda i: (0, 0)),     # W1 (grid-invariant)
            pl.BlockSpec((1, hid_pad), lambda i: (0, 0)),        # b1
            pl.BlockSpec((hid_pad, hid_pad), lambda i: (0, 0)),  # W2 (shared hidden)
            pl.BlockSpec((1, hid_pad), lambda i: (0, 0)),        # b2
            pl.BlockSpec((hid_pad, out_n), lambda i: (0, 0)),    # W3
            pl.BlockSpec((1, out_n), lambda i: (0, 0)),          # b3
        ],
        out_specs=pl.BlockSpec((bt, out_n), lambda i: (i, 0)),   # unpadded output
        compiler_params=pltpu.CompilerParams(
            dimension_semantics=("parallel",),   # independent batch tiles (megacore)
            vmem_limit_bytes=vmem_limit,
        ),
        cost_estimate=pl.CostEstimate(
            flops=flops, transcendentals=0, bytes_accessed=bytes_accessed),
    )(x_p, w1_p, b1_p, w2_p, b2_p, w3_p, b3_p)

    return y[:B] if b_pad != B else y


# --------------------------------------------------------------------------- #
# Reference + init helpers
# --------------------------------------------------------------------------- #
def init_linear(key, fan_in, fan_out, dtype=jnp.float32):
    """PyTorch nn.Linear default init (uniform +-1/sqrt(fan_in)); weight
    returned as (fan_in, fan_out), i.e. transposed vs. torch's (out, in)."""
    kw, kb = jax.random.split(key)
    bound = 1.0 / math.sqrt(fan_in)
    w = jax.random.uniform(kw, (fan_in, fan_out), dtype, minval=-bound, maxval=bound)
    b = jax.random.uniform(kb, (fan_out,), dtype, minval=-bound, maxval=bound)
    return w, b


def ann_reference(x, w1, b1, w2, b2, w3, b3):
    h = jnp.maximum(x @ w1 + b1, 0.0)
    h = jnp.maximum(h @ w2 + b2, 0.0)
    h = jnp.maximum(h @ w2 + b2, 0.0)
    return h @ w3 + b3


if __name__ == "__main__":
    # Small shapes consistent with the interpolation MLP.
    batch, in_neuron, hidden_neuron, out_neuron = 8, 4, 32, 1

    key = jax.random.PRNGKey(0)
    kx, k1, k2, k3 = jax.random.split(key, 4)

    x = jax.random.normal(kx, (batch, in_neuron), jnp.float32)
    w1, b1 = init_linear(k1, in_neuron, hidden_neuron)
    w2, b2 = init_linear(k2, hidden_neuron, hidden_neuron)
    w3, b3 = init_linear(k3, hidden_neuron, out_neuron)

    # Prepare (pad + cast) params ONCE, outside the hot path.
    params_f32 = prepare_ann_params(w1, b1, w2, b2, w3, b3,
                                    compute_dtype=jnp.float32)
    fwd_f32 = jax.jit(lambda xx: ann_forward(xx, params_f32))

    # 1) small batch, f32 (single grid step)
    y = jax.block_until_ready(fwd_f32(x))
    y_ref = ann_reference(x, w1, b1, w2, b2, w3, b3)
    assert y.shape == (batch, out_neuron)
    assert jnp.allclose(y, y_ref, atol=1e-5, rtol=1e-5), "f32 small-batch mismatch"

    # 2) larger batch -> >=2 grid steps (pipelining + v7x megacore sharding)
    xb = jax.random.normal(kx, (512, in_neuron), jnp.float32)
    yb = jax.block_until_ready(fwd_f32(xb))
    yb_ref = ann_reference(xb, w1, b1, w2, b2, w3, b3)
    assert yb.shape == (512, out_neuron)
    assert jnp.allclose(yb, yb_ref, atol=1e-5, rtol=1e-5), "f32 tiled-batch mismatch"

    # 3) bf16 compute path (recommended on v6e/v7x): weights bf16, f32 MXU
    #    accumulation, x cast in-kernel. Loose tolerance vs f32 reference.
    params_bf16 = prepare_ann_params(w1, b1, w2, b2, w3, b3,
                                     compute_dtype=jnp.bfloat16)
    fwd_bf16 = jax.jit(lambda xx: ann_forward(xx, params_bf16))
    yh = jax.block_until_ready(fwd_bf16(xb))
    assert jnp.allclose(yh, yb_ref, atol=1e-1, rtol=1e-1), "bf16 path mismatch"

    print("KERNEL_OK")
</pallas_src>

<mosaic_0001>
module attributes {stable_mosaic.version = 11 : i64} {
  func.func @ann_kernel(%arg0: i32, %arg1: memref<8x4xf32, #tpu.memory_space<vmem>>, %arg2: memref<4x128xf32, #tpu.memory_space<vmem>>, %arg3: memref<1x128xf32, #tpu.memory_space<vmem>>, %arg4: memref<128x128xf32, #tpu.memory_space<vmem>>, %arg5: memref<1x128xf32, #tpu.memory_space<vmem>>, %arg6: memref<128x1xf32, #tpu.memory_space<vmem>>, %arg7: memref<1x1xf32, #tpu.memory_space<vmem>>, %arg8: memref<8x1xf32, #tpu.memory_space<vmem>>) attributes {dimension_semantics = [#tpu.dimension_semantics<parallel>], iteration_bounds = array<i64: 1>, scalar_prefetch = 0 : i64, scratch_operands = 0 : i64, tpu.core_type = #tpu.core_type<tc>, window_params = [{transform_indices = @transform_0, window_bounds = array<i64: 8, 4>}, {pipeline_mode = #tpu.pipeline_mode<synchronous>, transform_indices = @transform_1, window_bounds = array<i64: 4, 128>}, {pipeline_mode = #tpu.pipeline_mode<synchronous>, transform_indices = @transform_2, window_bounds = array<i64: 1, 128>}, {pipeline_mode = #tpu.pipeline_mode<synchronous>, transform_indices = @transform_3, window_bounds = array<i64: 128, 128>}, {pipeline_mode = #tpu.pipeline_mode<synchronous>, transform_indices = @transform_4, window_bounds = array<i64: 1, 128>}, {pipeline_mode = #tpu.pipeline_mode<synchronous>, transform_indices = @transform_5, window_bounds = array<i64: 128, 1>}, {pipeline_mode = #tpu.pipeline_mode<synchronous>, transform_indices = @transform_6, window_bounds = array<i64: 1, 1>}, {transform_indices = @transform_7, window_bounds = array<i64: 8, 1>}]} {
    %c0 = arith.constant 0 : index
    %c0_0 = arith.constant 0 : index
    %0 = vector.load %arg1[%c0, %c0_0] : memref<8x4xf32, #tpu.memory_space<vmem>>, vector<8x4xf32>
    %c0_1 = arith.constant 0 : index
    %c0_2 = arith.constant 0 : index
    %1 = vector.load %arg2[%c0_1, %c0_2] : memref<4x128xf32, #tpu.memory_space<vmem>>, vector<4x128xf32>
    %cst = arith.constant dense<0.000000e+00> : vector<8x128xf32>
    %2 = tpu.matmul %0, %1, %cst {dimension_numbers = #tpu.dot_dimension_numbers<[1], [0], [0], [1], [0, 0, 1, 1], [], []>} : vector<8x4xf32>, vector<4x128xf32>, vector<8x128xf32> -> vector<8x128xf32>
    %c0_3 = arith.constant 0 : index
    %c0_4 = arith.constant 0 : index
    %3 = vector.load %arg3[%c0_3, %c0_4] : memref<1x128xf32, #tpu.memory_space<vmem>>, vector<1x128xf32>
    %4 = vector.broadcast %3 : vector<1x128xf32> to vector<8x128xf32>
    %5 = arith.addf %2, %4 : vector<8x128xf32>
    %cst_5 = arith.constant 0.000000e+00 : f32
    %6 = vector.broadcast %cst_5 : f32 to vector<8x128xf32>
    %7 = arith.maximumf %5, %6 : vector<8x128xf32>
    %c0_6 = arith.constant 0 : index
    %c0_7 = arith.constant 0 : index
    %8 = vector.load %arg4[%c0_6, %c0_7] : memref<128x128xf32, #tpu.memory_space<vmem>>, vector<128x128xf32>
    %cst_8 = arith.constant dense<0.000000e+00> : vector<8x128xf32>
    %9 = tpu.matmul %7, %8, %cst_8 {dimension_numbers = #tpu.dot_dimension_numbers<[1], [0], [0], [1], [0, 0, 1, 1], [], []>} : vector<8x128xf32>, vector<128x128xf32>, vector<8x128xf32> -> vector<8x128xf32>
    %c0_9 = arith.constant 0 : index
    %c0_10 = arith.constant 0 : index
    %10 = vector.load %arg5[%c0_9, %c0_10] : memref<1x128xf32, #tpu.memory_space<vmem>>, vector<1x128xf32>
    %11 = vector.broadcast %10 : vector<1x128xf32> to vector<8x128xf32>
    %12 = arith.addf %9, %11 : vector<8x128xf32>
    %cst_11 = arith.constant 0.000000e+00 : f32
    %13 = vector.broadcast %cst_11 : f32 to vector<8x128xf32>
    %14 = arith.maximumf %12, %13 : vector<8x128xf32>
    %c0_12 = arith.constant 0 : index
    %c0_13 = arith.constant 0 : index
    %15 = vector.load %arg4[%c0_12, %c0_13] : memref<128x128xf32, #tpu.memory_space<vmem>>, vector<128x128xf32>
    %cst_14 = arith.constant dense<0.000000e+00> : vector<8x128xf32>
    %16 = tpu.matmul %14, %15, %cst_14 {dimension_numbers = #tpu.dot_dimension_numbers<[1], [0], [0], [1], [0, 0, 1, 1], [], []>} : vector<8x128xf32>, vector<128x128xf32>, vector<8x128xf32> -> vector<8x128xf32>
    %c0_15 = arith.constant 0 : index
    %c0_16 = arith.constant 0 : index
    %17 = vector.load %arg5[%c0_15, %c0_16] : memref<1x128xf32, #tpu.memory_space<vmem>>, vector<1x128xf32>
    %18 = vector.broadcast %17 : vector<1x128xf32> to vector<8x128xf32>
    %19 = arith.addf %16, %18 : vector<8x128xf32>
    %cst_17 = arith.constant 0.000000e+00 : f32
    %20 = vector.broadcast %cst_17 : f32 to vector<8x128xf32>
    %21 = arith.maximumf %19, %20 : vector<8x128xf32>
    %c0_18 = arith.constant 0 : index
    %c0_19 = arith.constant 0 : index
    %22 = vector.load %arg6[%c0_18, %c0_19] : memref<128x1xf32, #tpu.memory_space<vmem>>, vector<128x1xf32>
    %cst_20 = arith.constant dense<0.000000e+00> : vector<8x1xf32>
    %23 = tpu.matmul %21, %22, %cst_20 {dimension_numbers = #tpu.dot_dimension_numbers<[1], [0], [0], [1], [0, 0, 1, 1], [], []>} : vector<8x128xf32>, vector<128x1xf32>, vector<8x1xf32> -> vector<8x1xf32>
    %c0_21 = arith.constant 0 : index
    %c0_22 = arith.constant 0 : index
    %24 = vector.load %arg7[%c0_21, %c0_22] : memref<1x1xf32, #tpu.memory_space<vmem>>, vector<1x1xf32>
    %25 = vector.broadcast %24 : vector<1x1xf32> to vector<8x1xf32>
    %26 = arith.addf %23, %25 : vector<8x1xf32>
    %c0_23 = arith.constant 0 : index
    %c0_24 = arith.constant 0 : index
    %27 = vector.load %arg8[%c0_23, %c0_24] : memref<8x1xf32, #tpu.memory_space<vmem>>, vector<8x1xf32>
    tpu.vector_store %arg8[%c0_23, %c0_24], %26 {strides = array<i32>} : memref<8x1xf32, #tpu.memory_space<vmem>>, vector<8x1xf32>,
    return
  }
  func.func @transform_0(%arg0: i32) -> (i32, i32) {
    %c0_i32 = arith.constant 0 : i32
    %c0_i32_0 = arith.constant 0 : i32
    return %arg0, %c0_i32 : i32, i32
  }
  func.func @transform_1(%arg0: i32) -> (i32, i32) {
    %c0_i32 = arith.constant 0 : i32
    %c0_i32_0 = arith.constant 0 : i32
    %c0_i32_1 = arith.constant 0 : i32
    return %c0_i32, %c0_i32_0 : i32, i32
  }
  func.func @transform_2(%arg0: i32) -> (i32, i32) {
    %c0_i32 = arith.constant 0 : i32
    %c0_i32_0 = arith.constant 0 : i32
    %c0_i32_1 = arith.constant 0 : i32
    return %c0_i32, %c0_i32_0 : i32, i32
  }
  func.func @transform_3(%arg0: i32) -> (i32, i32) {
    %c0_i32 = arith.constant 0 : i32
    %c0_i32_0 = arith.constant 0 : i32
    %c0_i32_1 = arith.constant 0 : i32
    return %c0_i32, %c0_i32_0 : i32, i32
  }
  func.func @transform_4(%arg0: i32) -> (i32, i32) {
    %c0_i32 = arith.constant 0 : i32
    %c0_i32_0 = arith.constant 0 : i32
    %c0_i32_1 = arith.constant 0 : i32
    return %c0_i32, %c0_i32_0 : i32, i32
  }
  func.func @transform_5(%arg0: i32) -> (i32, i32) {
    %c0_i32 = arith.constant 0 : i32
    %c0_i32_0 = arith.constant 0 : i32
    %c0_i32_1 = arith.constant 0 : i32
    return %c0_i32, %c0_i32_0 : i32, i32
  }
  func.func @transform_6(%arg0: i32) -> (i32, i32) {
    %c0_i32 = arith.constant 0 : i32
    %c0_i32_0 = arith.constant 0 : i32
    %c0_i32_1 = arith.constant 0 : i32
    return %c0_i32, %c0_i32_0 : i32, i32
  }
  func.func @transform_7(%arg0: i32) -> (i32, i32) {
    %c0_i32 = arith.constant 0 : i32
    %c0_i32_0 = arith.constant 0 : i32
    return %arg0, %c0_i32 : i32, i32
  }
}

</mosaic_0001>

<llo_original>
// kernel: _lambda_.1
$region0: #{_lambda_.1}
  #allocation0 [shape = 'u32[]', space=smem, size = 0x4, offset = 0x4, fixed_abs, tag = 'smem constant byte address 0x4 - core index']
  #allocation1 [shape = 'u32[144,128]{1,0:T(1,128)}', space=vmem, size = 0x12000, scoped, tag = 'internal scratch']
  #allocation2 [shape = 'f32[1,1]{1,0:T(1,128)S(1)}', space=vmem, size = 0x200, scoped, tag = 'scoped memory for _lambda_.1']
  %s0 = inlined_call_operand.vmem [shape: f32[8,4], index: 0, kind: input, shape index: {}]
  %s1 = inlined_call_operand.vmem [shape: f32[4,128], index: 1, kind: input, shape index: {}]
  %s2 = inlined_call_operand.vmem [shape: f32[1,128], index: 2, kind: input, shape index: {}]
  %s3 = inlined_call_operand.hbm [shape: f32[128,128], index: 3, kind: input, shape index: {}]
  %s4 = inlined_call_operand.vmem [shape: f32[1,128], index: 4, kind: input, shape index: {}]
  %s5 = inlined_call_operand.hbm [shape: f32[128,1], index: 5, kind: input, shape index: {}]
  %s6 = inlined_call_operand.<no memory space> [shape: f32[1,1], index: 6, kind: input, shape index: {}]
  %s7 = inlined_call_operand.vmem [shape: f32[8,1], index: 7, kind: output, shape index: {}]
  %s8 = sld [smem:[#allocation0]]
  $region46: #{_lambda_.1} parent=0
    _
  %s10 = ssub.s32 1, %s8
  %s11 = scalar_select 0, %s10, %s8
  %v12 = vstv %s6
  %13 = vst [vmem:[#allocation2] sm:$0x1] %v12
  $region1: #{_lambda_.1} parent=0
    #allocation3 [shape = 'u8[65536]{0}', space=vmem, size = 0x10000, scoped, tag = 'input window, operand 3, single buffered']
    #allocation4 [shape = 's32[1]{0}', space=sflag, size = 0x4, scoped, tag = 'scoped memory for _lambda_.1']
    #allocation5 [shape = 'u8[65536]{0}', space=vmem, size = 0x10000, scoped, tag = 'input window, operand 5, single buffered']
    #allocation6 [shape = 's32[1]{0}', space=sflag, size = 0x4, scoped, tag = 'scoped memory for _lambda_.1']
    %14 = vsyncpa [#allocation4], 0
    %15 = vsyncpa [#allocation6], 0
    // Predicated region
    $region2: #{_lambda_.1} parent=1 // pred_check
      _
    $region3: #{_lambda_.1} parent=1 // pred_check_branch
      %17 = sbr.rel (0) target = $region5
    $region4: #{_lambda_.1} parent=1 // pred_region
      _
    $region5: #{_lambda_.1} parent=1 // pred_fallthru
      _
    // Predicated region
    $region6: #{_lambda_.1} parent=1 // pred_check
      _
    $region7: #{_lambda_.1} parent=1 // pred_check_branch
      %19 = sbr.rel (0) target = $region9
    $region8: #{_lambda_.1} parent=1 // pred_region
      _
    $region9: #{_lambda_.1} parent=1 // pred_fallthru
      _
    // Predicated region
    $region10: #{_lambda_.1} parent=1 // pred_check
      _
    $region11: #{_lambda_.1} parent=1 // pred_check_branch
      %21 = sbr.rel (0) target = $region13
    $region12: #{_lambda_.1} parent=1 // pred_region
      _
    $region13: #{_lambda_.1} parent=1 // pred_fallthru
      _
    // Predicated region
    $region14: #{_lambda_.1} parent=1 // pred_check
      _
    $region15: #{_lambda_.1} parent=1 // pred_check_branch
      %23 = sbr.rel (0) target = $region17
    $region16: #{_lambda_.1} parent=1 // pred_region
      %s25 = ssub.s32 2048, 2048
      %26 = vsyncadd [#allocation4], %s25
      %s27 = sshll.u32 [#allocation3], 4
      %s28 = int_to_ptr.vmem [resolvable:$true] %s27
      %33 = dma.hbm_to_vmem [thread:$0]  %s3, 2048, %s28, [#allocation4], 128, 128, 8
    $region17: #{_lambda_.1} parent=1 // pred_fallthru
      _
    // Predicated region
    $region18: #{_lambda_.1} parent=1 // pred_check
      _
    $region19: #{_lambda_.1} parent=1 // pred_check_branch
      %35 = sbr.rel (0) target = $region21
    $region20: #{_lambda_.1} parent=1 // pred_region
      _
    $region21: #{_lambda_.1} parent=1 // pred_fallthru
      _
    // Predicated region
    $region22: #{_lambda_.1} parent=1 // pred_check
      _
    $region23: #{_lambda_.1} parent=1 // pred_check_branch
      %37 = sbr.rel (0) target = $region25
    $region24: #{_lambda_.1} parent=1 // pred_region
      %s39 = ssub.s32 2048, 2048
      %40 = vsyncadd [#allocation6], %s39
      %s41 = sshll.u32 [#allocation5], 4
      %s42 = int_to_ptr.vmem [resolvable:$true] %s41
      %47 = dma.hbm_to_vmem [thread:$0]  %s5, 2048, %s42, [#allocation6], 128, 128, 8
    $region25: #{_lambda_.1} parent=1 // pred_fallthru
      _
    // Predicated region
    $region26: #{_lambda_.1} parent=1 // pred_check
      _
    $region27: #{_lambda_.1} parent=1 // pred_check_branch
      %49 = sbr.rel (0) target = $region29
    $region28: #{_lambda_.1} parent=1 // pred_region
      _
    $region29: #{_lambda_.1} parent=1 // pred_fallthru
      _
    // Predicated region
    $region30: #{_lambda_.1} parent=1 // pred_check
      _
    $region31: #{_lambda_.1} parent=1 // pred_check_branch
      %51 = sbr.rel (0) target = $region33
    $region32: #{_lambda_.1} parent=1 // pred_region
      %52 = dma.done [#allocation4], 2048
    $region33: #{_lambda_.1} parent=1 // pred_fallthru
      _
    // Predicated region
    $region34: #{_lambda_.1} parent=1 // pred_check
      _
    $region35: #{_lambda_.1} parent=1 // pred_check_branch
      %54 = sbr.rel (0) target = $region37
    $region36: #{_lambda_.1} parent=1 // pred_region
      %55 = dma.done [#allocation6], 2048
    $region37: #{_lambda_.1} parent=1 // pred_fallthru
      _
    %v56 = vld [vmem:[%s0] sm:$0xff]
    %v57 = vld [vmem:[%s1] sm:$0xf]
    %v58 = vld [vmem:[%s2] sm:$0x1]
    %v60 = vlaneseq
    %v61 = vshrl.u32 %v60, 7
    %v62 = vsub.s32 0, %v61
    %v63 = vrot.slane %v58, %v62
    %vm65 = vcmask 31744
    %v67 = vsel %vm65, %v56, 0
    %vm69 = vcmask 1043456
    %v71 = vsel %vm69, %v57, 0
    %73 = vmatprep.subr.mxu0 0.0
    %74 = vmatpush1.msra.mxu0 %v71
    %75 = vmatprep.subr.mxu0 0.0
    %76 = vmatpush1.msra.mxu0 0.0
    %77 = vmatprep.subr.mxu0 0.0
    %78 = vmatpush1.msra.mxu0 0.0
    %79 = vmatprep.subr.mxu0 0.0
    %80 = vmatpush1.msra.mxu0 0.0
    %81 = vmatprep.subr.mxu0 0.0
    %82 = vmatpush1.msra.mxu0 0.0
    %83 = vmatprep.subr.mxu0 0.0
    %84 = vmatpush1.msra.mxu0 0.0
    %85 = vmatprep.subr.mxu0 0.0
    %86 = vmatpush1.msra.mxu0 0.0
    %87 = vmatprep.subr.mxu0 0.0
    %88 = vmatpush1.msra.mxu0 0.0
    %89 = vmatprep.subr.mxu0 0.0
    %90 = vmatpush1.msra.mxu0 0.0
    %91 = vmatprep.subr.mxu0 0.0
    %92 = vmatpush1.msra.mxu0 0.0
    %93 = vmatprep.subr.mxu0 0.0
    %94 = vmatpush1.msra.mxu0 0.0
    %95 = vmatprep.subr.mxu0 0.0
    %96 = vmatpush1.msra.mxu0 0.0
    %97 = vmatprep.subr.mxu0 0.0
    %98 = vmatpush1.msra.mxu0 0.0
    %99 = vmatprep.subr.mxu0 0.0
    %100 = vmatpush1.msra.mxu0 0.0
    %101 = vmatprep.subr.mxu0 0.0
    %102 = vmatpush1.msra.mxu0 0.0
    %103 = vmatprep.subr.mxu0 0.0
    %104 = vmatpush1.msra.mxu0 0.0
    %105 = vmatprep.subr.mxu0 0.0
    %106 = vmatpush1.msra.mxu0 0.0
    %107 = vmatprep.subr.mxu0 0.0
    %108 = vmatpush1.msra.mxu0 0.0
    %109 = vmatprep.subr.mxu0 0.0
    %110 = vmatpush1.msra.mxu0 0.0
    %111 = vmatprep.subr.mxu0 0.0
    %112 = vmatpush1.msra.mxu0 0.0
    %113 = vmatprep.subr.mxu0 0.0
    %114 = vmatpush1.msra.mxu0 0.0
    %115 = vmatprep.subr.mxu0 0.0
    %116 = vmatpush1.msra.mxu0 0.0
    %117 = vmatprep.subr.mxu0 0.0
    %118 = vmatpush1.msra.mxu0 0.0
    %119 = vmatprep.subr.mxu0 0.0
    %120 = vmatpush1.msra.mxu0 0.0
    %121 = vmatprep.subr.mxu0 0.0
    %122 = vmatpush1.msra.mxu0 0.0
    %123 = vmatprep.subr.mxu0 0.0
    %124 = vmatpush1.msra.mxu0 0.0
    %125 = vmatprep.subr.mxu0 0.0
    %126 = vmatpush1.msra.mxu0 0.0
    %127 = vmatprep.subr.mxu0 0.0
    %128 = vmatpush1.msra.mxu0 0.0
    %129 = vmatprep.subr.mxu0 0.0
    %130 = vmatpush1.msra.mxu0 0.0
    %131 = vmatprep.subr.mxu0 0.0
    %132 = vmatpush1.msra.mxu0 0.0
    %133 = vmatprep.subr.mxu0 0.0
    %134 = vmatpush1.msra.mxu0 0.0
    %135 = vmatprep.subr.mxu0 0.0
    %136 = vmatpush1.msra.mxu0 0.0
    %137 = vmatprep.mubr.f32.mxu0 0.0
    %138 = vmatmul.mubr.f32.gmra.mrb[0].mxu0 %v67
    %v139 = vpop.f32.mrb[0].mxu0
    %v140 = vadd.f32 %v63, %v139
    %v141 = vpop.f32.mrb[0].mxu0
    %142 = vdwg.mxu0
    %v143 = vmax.f32 %v140, 0.0
    %v144 = vld [vmem:[#allocation3] sm:$0xff]
    %v145 = vld [vmem:[#allocation3 + $0x8] sm:$0xff]
    %v146 = vld [vmem:[#allocation3 + $0x10] sm:$0xff]
    %v147 = vld [vmem:[#allocation3 + $0x18] sm:$0xff]
    %v148 = vld [vmem:[#allocation3 + $0x20] sm:$0xff]
    %v149 = vld [vmem:[#allocation3 + $0x28] sm:$0xff]
    %v150 = vld [vmem:[#allocation3 + $0x30] sm:$0xff]
    %v151 = vld [vmem:[#allocation3 + $0x38] sm:$0xff]
    %v152 = vld [vmem:[#allocation3 + $0x40] sm:$0xff]
    %v153 = vld [vmem:[#allocation3 + $0x48] sm:$0xff]
    %v154 = vld [vmem:[#allocation3 + $0x50] sm:$0xff]
    %v155 = vld [vmem:[#allocation3 + $0x58] sm:$0xff]
    %v156 = vld [vmem:[#allocation3 + $0x60] sm:$0xff]
    %v157 = vld [vmem:[#allocation3 + $0x68] sm:$0xff]
    %v158 = vld [vmem:[#allocation3 + $0x70] sm:$0xff]
    %v159 = vld [vmem:[#allocation3 + $0x78] sm:$0xff]
    %v160 = vld [vmem:[%s4] sm:$0x1]
    %v162 = vlaneseq
    %v163 = vshrl.u32 %v162, 7
    %v164 = vsub.s32 0, %v163
    %v165 = vrot.slane %v160, %v164
    %167 = vmatprep.subr.mxu0 0.0
    %168 = vmatpush1.msra.mxu0 %v144
    %169 = vmatprep.subr.mxu0 0.0
    %170 = vmatpush1.msra.mxu0 %v145
    %171 = vmatprep.subr.mxu0 0.0
    %172 = vmatpush1.msra.mxu0 %v146
    %173 = vmatprep.subr.mxu0 0.0
    %174 = vmatpush1.msra.mxu0 %v147
    %175 = vmatprep.subr.mxu0 0.0
    %176 = vmatpush1.msra.mxu0 %v148
    %177 = vmatprep.subr.mxu0 0.0
    %178 = vmatpush1.msra.mxu0 %v149
    %179 = vmatprep.subr.mxu0 0.0
    %180 = vmatpush1.msra.mxu0 %v150
    %181 = vmatprep.subr.mxu0 0.0
    %182 = vmatpush1.msra.mxu0 %v151
    %183 = vmatprep.subr.mxu0 0.0
    %184 = vmatpush1.msra.mxu0 %v152
    %185 = vmatprep.subr.mxu0 0.0
    %186 = vmatpush1.msra.mxu0 %v153
    %187 = vmatprep.subr.mxu0 0.0
    %188 = vmatpush1.msra.mxu0 %v154
    %189 = vmatprep.subr.mxu0 0.0
    %190 = vmatpush1.msra.mxu0 %v155
    %191 = vmatprep.subr.mxu0 0.0
    %192 = vmatpush1.msra.mxu0 %v156
    %193 = vmatprep.subr.mxu0 0.0
    %194 = vmatpush1.msra.mxu0 %v157
    %195 = vmatprep.subr.mxu0 0.0
    %196 = vmatpush1.msra.mxu0 %v158
    %197 = vmatprep.subr.mxu0 0.0
    %198 = vmatpush1.msra.mxu0 %v159
    %199 = vmatprep.subr.mxu0 0.0
    %200 = vmatpush1.msra.mxu0 0.0
    %201 = vmatprep.subr.mxu0 0.0
    %202 = vmatpush1.msra.mxu0 0.0
    %203 = vmatprep.subr.mxu0 0.0
    %204 = vmatpush1.msra.mxu0 0.0
    %205 = vmatprep.subr.mxu0 0.0
    %206 = vmatpush1.msra.mxu0 0.0
    %207 = vmatprep.subr.mxu0 0.0
    %208 = vmatpush1.msra.mxu0 0.0
    %209 = vmatprep.subr.mxu0 0.0
    %210 = vmatpush1.msra.mxu0 0.0
    %211 = vmatprep.subr.mxu0 0.0
    %212 = vmatpush1.msra.mxu0 0.0
    %213 = vmatprep.subr.mxu0 0.0
    %214 = vmatpush1.msra.mxu0 0.0
    %215 = vmatprep.subr.mxu0 0.0
    %216 = vmatpush1.msra.mxu0 0.0
    %217 = vmatprep.subr.mxu0 0.0
    %218 = vmatpush1.msra.mxu0 0.0
    %219 = vmatprep.subr.mxu0 0.0
    %220 = vmatpush1.msra.mxu0 0.0
    %221 = vmatprep.subr.mxu0 0.0
    %222 = vmatpush1.msra.mxu0 0.0
    %223 = vmatprep.subr.mxu0 0.0
    %224 = vmatpush1.msra.mxu0 0.0
    %225 = vmatprep.subr.mxu0 0.0
    %226 = vmatpush1.msra.mxu0 0.0
    %227 = vmatprep.subr.mxu0 0.0
    %228 = vmatpush1.msra.mxu0 0.0
    %229 = vmatprep.subr.mxu0 0.0
    %230 = vmatpush1.msra.mxu0 0.0
    %231 = vmatprep.mubr.f32.mxu0 0.0
    %232 = vmatmul.mubr.f32.gmra.mrb[0].mxu0 %v143
    %v233 = vpop.f32.mrb[0].mxu0
    %v234 = vadd.f32 %v165, %v233
    %v235 = vpop.f32.mrb[0].mxu0
    %236 = vdwg.mxu0
    %v237 = vmax.f32 %v234, 0.0
    %238 = vmatprep.subr.mxu0 0.0
    %239 = vmatpush1.msra.mxu0 %v144
    %240 = vmatprep.subr.mxu0 0.0
    %241 = vmatpush1.msra.mxu0 %v145
    %242 = vmatprep.subr.mxu0 0.0
    %243 = vmatpush1.msra.mxu0 %v146
    %244 = vmatprep.subr.mxu0 0.0
    %245 = vmatpush1.msra.mxu0 %v147
    %246 = vmatprep.subr.mxu0 0.0
    %247 = vmatpush1.msra.mxu0 %v148
    %248 = vmatprep.subr.mxu0 0.0
    %249 = vmatpush1.msra.mxu0 %v149
    %250 = vmatprep.subr.mxu0 0.0
    %251 = vmatpush1.msra.mxu0 %v150
    %252 = vmatprep.subr.mxu0 0.0
    %253 = vmatpush1.msra.mxu0 %v151
    %254 = vmatprep.subr.mxu0 0.0
    %255 = vmatpush1.msra.mxu0 %v152
    %256 = vmatprep.subr.mxu0 0.0
    %257 = vmatpush1.msra.mxu0 %v153
    %258 = vmatprep.subr.mxu0 0.0
    %259 = vmatpush1.msra.mxu0 %v154
    %260 = vmatprep.subr.mxu0 0.0
    %261 = vmatpush1.msra.mxu0 %v155
    %262 = vmatprep.subr.mxu0 0.0
    %263 = vmatpush1.msra.mxu0 %v156
    %264 = vmatprep.subr.mxu0 0.0
    %265 = vmatpush1.msra.mxu0 %v157
    %266 = vmatprep.subr.mxu0 0.0
    %267 = vmatpush1.msra.mxu0 %v158
    %268 = vmatprep.subr.mxu0 0.0
    %269 = vmatpush1.msra.mxu0 %v159
    %270 = vmatprep.subr.mxu0 0.0
    %271 = vmatpush1.msra.mxu0 0.0
    %272 = vmatprep.subr.mxu0 0.0
    %273 = vmatpush1.msra.mxu0 0.0
    %274 = vmatprep.subr.mxu0 0.0
    %275 = vmatpush1.msra.mxu0 0.0
    %276 = vmatprep.subr.mxu0 0.0
    %277 = vmatpush1.msra.mxu0 0.0
    %278 = vmatprep.subr.mxu0 0.0
    %279 = vmatpush1.msra.mxu0 0.0
    %280 = vmatprep.subr.mxu0 0.0
    %281 = vmatpush1.msra.mxu0 0.0
    %282 = vmatprep.subr.mxu0 0.0
    %283 = vmatpush1.msra.mxu0 0.0
    %284 = vmatprep.subr.mxu0 0.0
    %285 = vmatpush1.msra.mxu0 0.0
    %286 = vmatprep.subr.mxu0 0.0
    %287 = vmatpush1.msra.mxu0 0.0
    %288 = vmatprep.subr.mxu0 0.0
    %289 = vmatpush1.msra.mxu0 0.0
    %290 = vmatprep.subr.mxu0 0.0
    %291 = vmatpush1.msra.mxu0 0.0
    %292 = vmatprep.subr.mxu0 0.0
    %293 = vmatpush1.msra.mxu0 0.0
    %294 = vmatprep.subr.mxu0 0.0
    %295 = vmatpush1.msra.mxu0 0.0
    %296 = vmatprep.subr.mxu0 0.0
    %297 = vmatpush1.msra.mxu0 0.0
    %298 = vmatprep.subr.mxu0 0.0
    %299 = vmatpush1.msra.mxu0 0.0
    %300 = vmatprep.subr.mxu0 0.0
    %301 = vmatpush1.msra.mxu0 0.0
    %302 = vmatprep.mubr.f32.mxu0 0.0
    %303 = vmatmul.mubr.f32.gmra.mrb[0].mxu0 %v237
    %v304 = vpop.f32.mrb[0].mxu0
    %v305 = vadd.f32 %v165, %v304
    %v306 = vpop.f32.mrb[0].mxu0
    %307 = vdwg.mxu0
    %v308 = vmax.f32 %v305, 0.0
    %v309 = vld [vmem:[#allocation5] sm:$0xff]
    %v310 = vld [vmem:[#allocation5 + $0x8] sm:$0xff]
    %v311 = vld [vmem:[#allocation5 + $0x10] sm:$0xff]
    %v312 = vld [vmem:[#allocation5 + $0x18] sm:$0xff]
    %v313 = vld [vmem:[#allocation5 + $0x20] sm:$0xff]
    %v314 = vld [vmem:[#allocation5 + $0x28] sm:$0xff]
    %v315 = vld [vmem:[#allocation5 + $0x30] sm:$0xff]
    %v316 = vld [vmem:[#allocation5 + $0x38] sm:$0xff]
    %v317 = vld [vmem:[#allocation5 + $0x40] sm:$0xff]
    %v318 = vld [vmem:[#allocation5 + $0x48] sm:$0xff]
    %v319 = vld [vmem:[#allocation5 + $0x50] sm:$0xff]
    %v320 = vld [vmem:[#allocation5 + $0x58] sm:$0xff]
    %v321 = vld [vmem:[#allocation5 + $0x60] sm:$0xff]
    %v322 = vld [vmem:[#allocation5 + $0x68] sm:$0xff]
    %v323 = vld [vmem:[#allocation5 + $0x70] sm:$0xff]
    %v324 = vld [vmem:[#allocation5 + $0x78] sm:$0xff]
    %v325 = vld [vmem:[#allocation2] sm:$0x1]
    %v327 = vlaneseq
    %v328 = vshrl.u32 %v327, 7
    %v329 = vsub.s32 0, %v328
    %v330 = vrot.slane %v325, %v329
    %332 = vmatprep.subr.mxu0 0.0
    %333 = vmatpush1.msra.mxu0 %v309
    %334 = vmatprep.subr.mxu0 0.0
    %335 = vmatpush1.msra.mxu0 %v310
    %336 = vmatprep.subr.mxu0 0.0
    %337 = vmatpush1.msra.mxu0 %v311
    %338 = vmatprep.subr.mxu0 0.0
    %339 = vmatpush1.msra.mxu0 %v312
    %340 = vmatprep.subr.mxu0 0.0
    %341 = vmatpush1.msra.mxu0 %v313
    %342 = vmatprep.subr.mxu0 0.0
    %343 = vmatpush1.msra.mxu0 %v314
    %344 = vmatprep.subr.mxu0 0.0
    %345 = vmatpush1.msra.mxu0 %v315
    %346 = vmatprep.subr.mxu0 0.0
    %347 = vmatpush1.msra.mxu0 %v316
    %348 = vmatprep.subr.mxu0 0.0
    %349 = vmatpush1.msra.mxu0 %v317
    %350 = vmatprep.subr.mxu0 0.0
    %351 = vmatpush1.msra.mxu0 %v318
    %352 = vmatprep.subr.mxu0 0.0
    %353 = vmatpush1.msra.mxu0 %v319
    %354 = vmatprep.subr.mxu0 0.0
    %355 = vmatpush1.msra.mxu0 %v320
    %356 = vmatprep.subr.mxu0 0.0
    %357 = vmatpush1.msra.mxu0 %v321
    %358 = vmatprep.subr.mxu0 0.0
    %359 = vmatpush1.msra.mxu0 %v322
    %360 = vmatprep.subr.mxu0 0.0
    %361 = vmatpush1.msra.mxu0 %v323
    %362 = vmatprep.subr.mxu0 0.0
    %363 = vmatpush1.msra.mxu0 %v324
    %364 = vmatprep.subr.mxu0 0.0
    %365 = vmatpush1.msra.mxu0 0.0
    %366 = vmatprep.subr.mxu0 0.0
    %367 = vmatpush1.msra.mxu0 0.0
    %368 = vmatprep.subr.mxu0 0.0
    %369 = vmatpush1.msra.mxu0 0.0
    %370 = vmatprep.subr.mxu0 0.0
    %371 = vmatpush1.msra.mxu0 0.0
    %372 = vmatprep.subr.mxu0 0.0
    %373 = vmatpush1.msra.mxu0 0.0
    %374 = vmatprep.subr.mxu0 0.0
    %375 = vmatpush1.msra.mxu0 0.0
    %376 = vmatprep.subr.mxu0 0.0
    %377 = vmatpush1.msra.mxu0 0.0
    %378 = vmatprep.subr.mxu0 0.0
    %379 = vmatpush1.msra.mxu0 0.0
    %380 = vmatprep.subr.mxu0 0.0
    %381 = vmatpush1.msra.mxu0 0.0
    %382 = vmatprep.subr.mxu0 0.0
    %383 = vmatpush1.msra.mxu0 0.0
    %384 = vmatprep.subr.mxu0 0.0
    %385 = vmatpush1.msra.mxu0 0.0
    %386 = vmatprep.subr.mxu0 0.0
    %387 = vmatpush1.msra.mxu0 0.0
    %388 = vmatprep.subr.mxu0 0.0
    %389 = vmatpush1.msra.mxu0 0.0
    %390 = vmatprep.subr.mxu0 0.0
    %391 = vmatpush1.msra.mxu0 0.0
    %392 = vmatprep.subr.mxu0 0.0
    %393 = vmatpush1.msra.mxu0 0.0
    %394 = vmatprep.subr.mxu0 0.0
    %395 = vmatpush1.msra.mxu0 0.0
    %396 = vmatprep.mubr.f32.mxu0 0.0
    %397 = vmatmul.mubr.f32.gmra.mrb[0].mxu0 %v308
    %v398 = vpop.f32.mrb[0].mxu0
    %v399 = vadd.f32 %v330, %v398
    %v400 = vpop.f32.mrb[0].mxu0
    %401 = vdwg.mxu0
    %vm402 = vcmask 7168
    %403 = vst.msk [vmem:[%s7] sm:$0xff] %vm402, %v399
    // Predicated region
    $region38: #{_lambda_.1} parent=1 // pred_check
      _
    $region39: #{_lambda_.1} parent=1 // pred_check_branch
      %405 = sbr.rel (0) target = $region41
    $region40: #{_lambda_.1} parent=1 // pred_region
      _
    $region41: #{_lambda_.1} parent=1 // pred_fallthru
      _
    // Predicated region
    $region42: #{_lambda_.1} parent=1 // pred_check
      _
    $region43: #{_lambda_.1} parent=1 // pred_check_branch
      %407 = sbr.rel (0) target = $region45
    $region44: #{_lambda_.1} parent=1 // pred_region
      _
    $region45: #{_lambda_.1} parent=1 // pred_fallthru
      _
    %408 = vsyncpa [#allocation4], 1
    %409 = vsyncpa [#allocation6], 1

</llo_original>
